<compile_context>
chip_gen: v6e
topology: v6e:2x2x1
jax: 0.10.0
libtpu: 0.0.40
codegen_flags: <defaults>
</compile_context>

<pallas_src>
import jax
import jax.numpy as jnp
from jax.experimental import pallas as pl
from jax.experimental.pallas import tpu as pltpu


def _make_rcu_kernel(H, W, C, n_blocks, n_stages):
    HW = H * W

    def kernel(x_ref, w_ref, m_ref, o_ref):
        # x_ref: (1, C, HW) f32   w_ref: (S, C, 9C) bf16   m_ref: (9C, HW) f32
        mask = m_ref[...]                          # loaded once, reused by all stages
        x = x_ref[0].astype(jnp.float32)           # (C, HW), lane-dense

        # Demo-sized n_blocks*n_stages: full unroll is fine (see header for
        # the fori_loop variant at larger S).
        for i in range(n_blocks):
            residual = x                           # pre-activation block input
            for j in range(n_stages):
                xa = jnp.maximum(x, 0.0)           # fused ReLU (f32 VPU)
                taps = []
                for dy in range(3):
                    for dx in range(3):
                        shift = (dy - 1) * W + (dx - 1)    # static Python int
                        if shift == 0:
                            taps.append(xa)                # center tap: no roll
                        else:
                            taps.append(pltpu.roll(xa, (-shift) % HW, axis=1))
                stacked = jnp.concatenate(taps, axis=0)    # (9C, HW) f32
                # one fused border-mask multiply, then bf16 for the MXU
                stacked = (stacked * mask).astype(jnp.bfloat16)
                s = i * n_stages + j
                x = jnp.dot(w_ref[s], stacked,
                            preferred_element_type=jnp.float32)  # (C, HW) f32
            x = x + residual                       # residual add (f32)
        o_ref[0] = x.astype(o_ref.dtype)

    return kernel


def rcu_block_pallas(x_nchw, weights_oihw, n_blocks, n_stages):
    """RCUBlock forward.

    x_nchw:       (N, C, H, W) input (PyTorch layout).
    weights_oihw: weights_oihw[i][j] is the (C, C, 3, 3) OIHW weight of conv
                  '{i+1}_{j+1}'.
    """
    N, C, H, W = x_nchw.shape
    HW = H * W
    S = n_blocks * n_stages

    # Pad channels to the f32 sublane tile (8) so vregs / MXU rows are full.
    Cp = max(8, -(-C // 8) * 8)
    pad_c = Cp - C

    x_flat = x_nchw.reshape(N, C, HW)
    if pad_c:
        x_flat = jnp.pad(x_flat, ((0, 0), (0, pad_c), (0, 0)))

    # Per-stage fused weights: [W_tap0 | ... | W_tap8] -> (Cp, 9*Cp), bf16.
    w_rows = []
    for i in range(n_blocks):
        for j in range(n_stages):
            w = weights_oihw[i][j]                 # (Cout, Cin, 3, 3)
            if pad_c:
                w = jnp.pad(w, ((0, pad_c), (0, pad_c), (0, 0), (0, 0)))
            taps = [w[:, :, dy, dx] for dy in range(3) for dx in range(3)]
            w_rows.append(jnp.concatenate(taps, axis=1))       # (Cp, 9*Cp)
    w_stack = jnp.stack(w_rows, axis=0).astype(jnp.bfloat16)   # (S, Cp, 9*Cp)

    # Border masks for the 9 taps, precomputed host-side (hoisted out of the
    # kernel / grid loop), already broadcast to the stacked-tap shape.
    pos = jnp.arange(HW, dtype=jnp.int32)
    h_id, w_id = pos // W, pos % W
    mask_rows = []
    for dy in range(3):
        for dx in range(3):
            oh, ow = dy - 1, dx - 1
            m = ((h_id >= -oh) & (h_id < H - oh)
                 & (w_id >= -ow) & (w_id < W - ow)).astype(jnp.float32)
            mask_rows.append(jnp.broadcast_to(m[None, :], (Cp, HW)))
    masks = jnp.concatenate(mask_rows, axis=0)                  # (9*Cp, HW)

    kernel = _make_rcu_kernel(H, W, Cp, n_blocks, n_stages)

    act_isize = jnp.dtype(x_nchw.dtype).itemsize
    flops = 2 * N * S * Cp * (9 * Cp) * HW
    bytes_accessed = (2 * N * Cp * HW * act_isize    # activations in + out
                      + S * Cp * 9 * Cp * 2          # bf16 weights
                      + 9 * Cp * HW * 4)             # f32 masks

    out = pl.pallas_call(
        kernel,
        out_shape=jax.ShapeDtypeStruct((N, Cp, HW), x_nchw.dtype),
        grid=(N,),
        in_specs=[
            pl.BlockSpec((1, Cp, HW), lambda n: (n, 0, 0)),
            pl.BlockSpec((S, Cp, 9 * Cp), lambda n: (0, 0, 0)),   # VMEM-resident
            pl.BlockSpec((9 * Cp, HW), lambda n: (0, 0)),         # VMEM-resident
        ],
        out_specs=pl.BlockSpec((1, Cp, HW), lambda n: (n, 0, 0)),
        compiler_params=pltpu.CompilerParams(
            dimension_semantics=("parallel",),
            vmem_limit_bytes=32 * 1024 * 1024),
        cost_estimate=pl.CostEstimate(
            flops=flops, transcendentals=0, bytes_accessed=bytes_accessed),
    )(x_flat, w_stack, masks)

    out = out.reshape(N, Cp, H, W)
    return out[:, :C] if pad_c else out


def rcu_block_reference(x_nchw, weights_oihw, n_blocks, n_stages):
    """Plain-JAX NCHW reference, mirrors the PyTorch forward."""
    dn = jax.lax.conv_dimension_numbers(
        x_nchw.shape, weights_oihw[0][0].shape, ("NCHW", "OIHW", "NCHW"))
    x = x_nchw
    for i in range(n_blocks):
        residual = x
        for j in range(n_stages):
            x = jnp.maximum(x, 0.0)
            x = jax.lax.conv_general_dilated(
                x, weights_oihw[i][j], window_strides=(1, 1),
                padding=((1, 1), (1, 1)), dimension_numbers=dn)
        x = x + residual
    return x


if __name__ == "__main__":
    # Small, deterministic configuration (PyTorch-style NCHW input).
    N, C, H, W = 2, 4, 16, 16
    n_blocks, n_stages = 2, 2

    key = jax.random.PRNGKey(0)
    key, kx = jax.random.split(key)
    x_nchw = jax.random.normal(kx, (N, C, H, W), dtype=jnp.float32)

    # Deterministic conv weights in PyTorch OIHW layout.
    weights = []
    for i in range(n_blocks):
        row = []
        for j in range(n_stages):
            key, kw = jax.random.split(key)
            row.append(jax.random.normal(kw, (C, C, 3, 3), dtype=jnp.float32) * 0.1)
        weights.append(row)

    out = jax.block_until_ready(
        rcu_block_pallas(x_nchw, weights, n_blocks, n_stages))
    ref = jax.block_until_ready(
        rcu_block_reference(x_nchw, weights, n_blocks, n_stages))

    assert out.shape == (N, C, H, W)
    # bf16 MXU operands drift slightly from the f32 reference conv.
    rel_err = float(jnp.max(jnp.abs(out - ref)) / (jnp.max(jnp.abs(ref)) + 1e-6))
    assert rel_err < 3e-2, f"mismatch vs reference: rel_err={rel_err}"

    print("KERNEL_OK")
</pallas_src>

<mosaic_0001>
module attributes {stable_mosaic.version = 11 : i64} {
  func.func @kernel(%arg0: i32, %arg1: memref<1x8x256xf32, #tpu.memory_space<vmem>>, %arg2: memref<4x8x72xbf16, #tpu.memory_space<vmem>>, %arg3: memref<72x256xf32, #tpu.memory_space<vmem>>, %arg4: memref<1x8x256xf32, #tpu.memory_space<vmem>>) attributes {dimension_semantics = [#tpu.dimension_semantics<parallel>], iteration_bounds = array<i64: 2>, scalar_prefetch = 0 : i64, scratch_operands = 0 : i64, tpu.core_type = #tpu.core_type<tc>, window_params = [{transform_indices = @transform_0, window_bounds = array<i64: 1, 8, 256>}, {pipeline_mode = #tpu.pipeline_mode<synchronous>, transform_indices = @transform_1, window_bounds = array<i64: 4, 8, 72>}, {pipeline_mode = #tpu.pipeline_mode<synchronous>, transform_indices = @transform_2, window_bounds = array<i64: 72, 256>}, {transform_indices = @transform_3, window_bounds = array<i64: 1, 8, 256>}]} {
    %c0 = arith.constant 0 : index
    %c0_0 = arith.constant 0 : index
    %0 = vector.load %arg3[%c0, %c0_0] : memref<72x256xf32, #tpu.memory_space<vmem>>, vector<72x256xf32>
    %c0_1 = arith.constant 0 : index
    %c0_2 = arith.constant 0 : index
    %c0_3 = arith.constant 0 : index
    %1 = vector.load %arg1[%c0_1, %c0_2, %c0_3] : memref<1x8x256xf32, #tpu.memory_space<vmem>>, vector<1x8x256xf32>
    %2 = vector.shape_cast %1 : vector<1x8x256xf32> to vector<8x256xf32>
    %cst = arith.constant 0.000000e+00 : f32
    %3 = vector.broadcast %cst : f32 to vector<8x256xf32>
    %4 = arith.maximumf %2, %3 : vector<8x256xf32>
    %c17_i32 = arith.constant 17 : i32
    %5 = tpu.dynamic_rotate %4 by %c17_i32 dim 1 : vector<8x256xf32>, i32 -> vector<8x256xf32>
    %c16_i32 = arith.constant 16 : i32
    %6 = tpu.dynamic_rotate %4 by %c16_i32 dim 1 : vector<8x256xf32>, i32 -> vector<8x256xf32>
    %c15_i32 = arith.constant 15 : i32
    %7 = tpu.dynamic_rotate %4 by %c15_i32 dim 1 : vector<8x256xf32>, i32 -> vector<8x256xf32>
    %c1_i32 = arith.constant 1 : i32
    %8 = tpu.dynamic_rotate %4 by %c1_i32 dim 1 : vector<8x256xf32>, i32 -> vector<8x256xf32>
    %c255_i32 = arith.constant 255 : i32
    %9 = tpu.dynamic_rotate %4 by %c255_i32 dim 1 : vector<8x256xf32>, i32 -> vector<8x256xf32>
    %c241_i32 = arith.constant 241 : i32
    %10 = tpu.dynamic_rotate %4 by %c241_i32 dim 1 : vector<8x256xf32>, i32 -> vector<8x256xf32>
    %c240_i32 = arith.constant 240 : i32
    %11 = tpu.dynamic_rotate %4 by %c240_i32 dim 1 : vector<8x256xf32>, i32 -> vector<8x256xf32>
    %c239_i32 = arith.constant 239 : i32
    %12 = tpu.dynamic_rotate %4 by %c239_i32 dim 1 : vector<8x256xf32>, i32 -> vector<8x256xf32>
    %13 = tpu.concatenate %5, %6, %7, %8, %4, %9, %10, %11, %12 in 0 : vector<8x256xf32>, vector<8x256xf32>, vector<8x256xf32>, vector<8x256xf32>, vector<8x256xf32>, vector<8x256xf32>, vector<8x256xf32>, vector<8x256xf32>, vector<8x256xf32> -> vector<72x256xf32>
    %14 = arith.mulf %13, %0 : vector<72x256xf32>
    %15 = arith.truncf %14 : vector<72x256xf32> to vector<72x256xbf16>
    %c0_4 = arith.constant 0 : index
    %c0_5 = arith.constant 0 : index
    %c0_6 = arith.constant 0 : index
    %16 = vector.load %arg2[%c0_4, %c0_5, %c0_6] : memref<4x8x72xbf16, #tpu.memory_space<vmem>>, vector<1x8x72xbf16>
    %17 = vector.shape_cast %16 : vector<1x8x72xbf16> to vector<8x72xbf16>
    %cst_7 = arith.constant dense<0.000000e+00> : vector<8x256xf32>
    %18 = tpu.matmul %17, %15, %cst_7 {dimension_numbers = #tpu.dot_dimension_numbers<[1], [0], [0], [1], [0, 0, 1, 1], [], []>} : vector<8x72xbf16>, vector<72x256xbf16>, vector<8x256xf32> -> vector<8x256xf32>
    %cst_8 = arith.constant 0.000000e+00 : f32
    %19 = vector.broadcast %cst_8 : f32 to vector<8x256xf32>
    %20 = arith.maximumf %18, %19 : vector<8x256xf32>
    %c17_i32_9 = arith.constant 17 : i32
    %21 = tpu.dynamic_rotate %20 by %c17_i32_9 dim 1 : vector<8x256xf32>, i32 -> vector<8x256xf32>
    %c16_i32_10 = arith.constant 16 : i32
    %22 = tpu.dynamic_rotate %20 by %c16_i32_10 dim 1 : vector<8x256xf32>, i32 -> vector<8x256xf32>
    %c15_i32_11 = arith.constant 15 : i32
    %23 = tpu.dynamic_rotate %20 by %c15_i32_11 dim 1 : vector<8x256xf32>, i32 -> vector<8x256xf32>
    %c1_i32_12 = arith.constant 1 : i32
    %24 = tpu.dynamic_rotate %20 by %c1_i32_12 dim 1 : vector<8x256xf32>, i32 -> vector<8x256xf32>
    %c255_i32_13 = arith.constant 255 : i32
    %25 = tpu.dynamic_rotate %20 by %c255_i32_13 dim 1 : vector<8x256xf32>, i32 -> vector<8x256xf32>
    %c241_i32_14 = arith.constant 241 : i32
    %26 = tpu.dynamic_rotate %20 by %c241_i32_14 dim 1 : vector<8x256xf32>, i32 -> vector<8x256xf32>
    %c240_i32_15 = arith.constant 240 : i32
    %27 = tpu.dynamic_rotate %20 by %c240_i32_15 dim 1 : vector<8x256xf32>, i32 -> vector<8x256xf32>
    %c239_i32_16 = arith.constant 239 : i32
    %28 = tpu.dynamic_rotate %20 by %c239_i32_16 dim 1 : vector<8x256xf32>, i32 -> vector<8x256xf32>
    %29 = tpu.concatenate %21, %22, %23, %24, %20, %25, %26, %27, %28 in 0 : vector<8x256xf32>, vector<8x256xf32>, vector<8x256xf32>, vector<8x256xf32>, vector<8x256xf32>, vector<8x256xf32>, vector<8x256xf32>, vector<8x256xf32>, vector<8x256xf32> -> vector<72x256xf32>
    %30 = arith.mulf %29, %0 : vector<72x256xf32>
    %31 = arith.truncf %30 : vector<72x256xf32> to vector<72x256xbf16>
    %c1 = arith.constant 1 : index
    %c0_17 = arith.constant 0 : index
    %c0_18 = arith.constant 0 : index
    %32 = vector.load %arg2[%c1, %c0_17, %c0_18] : memref<4x8x72xbf16, #tpu.memory_space<vmem>>, vector<1x8x72xbf16>
    %33 = vector.shape_cast %32 : vector<1x8x72xbf16> to vector<8x72xbf16>
    %cst_19 = arith.constant dense<0.000000e+00> : vector<8x256xf32>
    %34 = tpu.matmul %33, %31, %cst_19 {dimension_numbers = #tpu.dot_dimension_numbers<[1], [0], [0], [1], [0, 0, 1, 1], [], []>} : vector<8x72xbf16>, vector<72x256xbf16>, vector<8x256xf32> -> vector<8x256xf32>
    %35 = arith.addf %34, %2 : vector<8x256xf32>
    %cst_20 = arith.constant 0.000000e+00 : f32
    %36 = vector.broadcast %cst_20 : f32 to vector<8x256xf32>
    %37 = arith.maximumf %35, %36 : vector<8x256xf32>
    %c17_i32_21 = arith.constant 17 : i32
    %38 = tpu.dynamic_rotate %37 by %c17_i32_21 dim 1 : vector<8x256xf32>, i32 -> vector<8x256xf32>
    %c16_i32_22 = arith.constant 16 : i32
    %39 = tpu.dynamic_rotate %37 by %c16_i32_22 dim 1 : vector<8x256xf32>, i32 -> vector<8x256xf32>
    %c15_i32_23 = arith.constant 15 : i32
    %40 = tpu.dynamic_rotate %37 by %c15_i32_23 dim 1 : vector<8x256xf32>, i32 -> vector<8x256xf32>
    %c1_i32_24 = arith.constant 1 : i32
    %41 = tpu.dynamic_rotate %37 by %c1_i32_24 dim 1 : vector<8x256xf32>, i32 -> vector<8x256xf32>
    %c255_i32_25 = arith.constant 255 : i32
    %42 = tpu.dynamic_rotate %37 by %c255_i32_25 dim 1 : vector<8x256xf32>, i32 -> vector<8x256xf32>
    %c241_i32_26 = arith.constant 241 : i32
    %43 = tpu.dynamic_rotate %37 by %c241_i32_26 dim 1 : vector<8x256xf32>, i32 -> vector<8x256xf32>
    %c240_i32_27 = arith.constant 240 : i32
    %44 = tpu.dynamic_rotate %37 by %c240_i32_27 dim 1 : vector<8x256xf32>, i32 -> vector<8x256xf32>
    %c239_i32_28 = arith.constant 239 : i32
    %45 = tpu.dynamic_rotate %37 by %c239_i32_28 dim 1 : vector<8x256xf32>, i32 -> vector<8x256xf32>
    %46 = tpu.concatenate %38, %39, %40, %41, %37, %42, %43, %44, %45 in 0 : vector<8x256xf32>, vector<8x256xf32>, vector<8x256xf32>, vector<8x256xf32>, vector<8x256xf32>, vector<8x256xf32>, vector<8x256xf32>, vector<8x256xf32>, vector<8x256xf32> -> vector<72x256xf32>
    %47 = arith.mulf %46, %0 : vector<72x256xf32>
    %48 = arith.truncf %47 : vector<72x256xf32> to vector<72x256xbf16>
    %c2 = arith.constant 2 : index
    %c0_29 = arith.constant 0 : index
    %c0_30 = arith.constant 0 : index
    %49 = vector.load %arg2[%c2, %c0_29, %c0_30] : memref<4x8x72xbf16, #tpu.memory_space<vmem>>, vector<1x8x72xbf16>
    %50 = vector.shape_cast %49 : vector<1x8x72xbf16> to vector<8x72xbf16>
    %cst_31 = arith.constant dense<0.000000e+00> : vector<8x256xf32>
    %51 = tpu.matmul %50, %48, %cst_31 {dimension_numbers = #tpu.dot_dimension_numbers<[1], [0], [0], [1], [0, 0, 1, 1], [], []>} : vector<8x72xbf16>, vector<72x256xbf16>, vector<8x256xf32> -> vector<8x256xf32>
    %cst_32 = arith.constant 0.000000e+00 : f32
    %52 = vector.broadcast %cst_32 : f32 to vector<8x256xf32>
    %53 = arith.maximumf %51, %52 : vector<8x256xf32>
    %c17_i32_33 = arith.constant 17 : i32
    %54 = tpu.dynamic_rotate %53 by %c17_i32_33 dim 1 : vector<8x256xf32>, i32 -> vector<8x256xf32>
    %c16_i32_34 = arith.constant 16 : i32
    %55 = tpu.dynamic_rotate %53 by %c16_i32_34 dim 1 : vector<8x256xf32>, i32 -> vector<8x256xf32>
    %c15_i32_35 = arith.constant 15 : i32
    %56 = tpu.dynamic_rotate %53 by %c15_i32_35 dim 1 : vector<8x256xf32>, i32 -> vector<8x256xf32>
    %c1_i32_36 = arith.constant 1 : i32
    %57 = tpu.dynamic_rotate %53 by %c1_i32_36 dim 1 : vector<8x256xf32>, i32 -> vector<8x256xf32>
    %c255_i32_37 = arith.constant 255 : i32
    %58 = tpu.dynamic_rotate %53 by %c255_i32_37 dim 1 : vector<8x256xf32>, i32 -> vector<8x256xf32>
    %c241_i32_38 = arith.constant 241 : i32
    %59 = tpu.dynamic_rotate %53 by %c241_i32_38 dim 1 : vector<8x256xf32>, i32 -> vector<8x256xf32>
    %c240_i32_39 = arith.constant 240 : i32
    %60 = tpu.dynamic_rotate %53 by %c240_i32_39 dim 1 : vector<8x256xf32>, i32 -> vector<8x256xf32>
    %c239_i32_40 = arith.constant 239 : i32
    %61 = tpu.dynamic_rotate %53 by %c239_i32_40 dim 1 : vector<8x256xf32>, i32 -> vector<8x256xf32>
    %62 = tpu.concatenate %54, %55, %56, %57, %53, %58, %59, %60, %61 in 0 : vector<8x256xf32>, vector<8x256xf32>, vector<8x256xf32>, vector<8x256xf32>, vector<8x256xf32>, vector<8x256xf32>, vector<8x256xf32>, vector<8x256xf32>, vector<8x256xf32> -> vector<72x256xf32>
    %63 = arith.mulf %62, %0 : vector<72x256xf32>
    %64 = arith.truncf %63 : vector<72x256xf32> to vector<72x256xbf16>
    %c3 = arith.constant 3 : index
    %c0_41 = arith.constant 0 : index
    %c0_42 = arith.constant 0 : index
    %65 = vector.load %arg2[%c3, %c0_41, %c0_42] : memref<4x8x72xbf16, #tpu.memory_space<vmem>>, vector<1x8x72xbf16>
    %66 = vector.shape_cast %65 : vector<1x8x72xbf16> to vector<8x72xbf16>
    %cst_43 = arith.constant dense<0.000000e+00> : vector<8x256xf32>
    %67 = tpu.matmul %66, %64, %cst_43 {dimension_numbers = #tpu.dot_dimension_numbers<[1], [0], [0], [1], [0, 0, 1, 1], [], []>} : vector<8x72xbf16>, vector<72x256xbf16>, vector<8x256xf32> -> vector<8x256xf32>
    %68 = arith.addf %67, %35 : vector<8x256xf32>
    %c0_44 = arith.constant 0 : index
    %c0_45 = arith.constant 0 : index
    %c0_46 = arith.constant 0 : index
    %69 = vector.load %arg4[%c0_44, %c0_45, %c0_46] : memref<1x8x256xf32, #tpu.memory_space<vmem>>, vector<1x8x256xf32>
    %70 = vector.shape_cast %69 : vector<1x8x256xf32> to vector<8x256xf32>
    %71 = vector.shape_cast %68 : vector<8x256xf32> to vector<1x8x256xf32>
    tpu.vector_store %arg4[%c0_44, %c0_45, %c0_46], %71 {strides = array<i32>} : memref<1x8x256xf32, #tpu.memory_space<vmem>>, vector<1x8x256xf32>,
    return
  }
  func.func @transform_0(%arg0: i32) -> (i32, i32, i32) {
    %c0_i32 = arith.constant 0 : i32
    %c0_i32_0 = arith.constant 0 : i32
    %c0_i32_1 = arith.constant 0 : i32
    return %arg0, %c0_i32, %c0_i32_0 : i32, i32, i32
  }
  func.func @transform_1(%arg0: i32) -> (i32, i32, i32) {
    %c0_i32 = arith.constant 0 : i32
    %c0_i32_0 = arith.constant 0 : i32
    %c0_i32_1 = arith.constant 0 : i32
    %c0_i32_2 = arith.constant 0 : i32
    return %c0_i32, %c0_i32_0, %c0_i32_1 : i32, i32, i32
  }
  func.func @transform_2(%arg0: i32) -> (i32, i32) {
    %c0_i32 = arith.constant 0 : i32
    %c0_i32_0 = arith.constant 0 : i32
    %c0_i32_1 = arith.constant 0 : i32
    return %c0_i32, %c0_i32_0 : i32, i32
  }
  func.func @transform_3(%arg0: i32) -> (i32, i32, i32) {
    %c0_i32 = arith.constant 0 : i32
    %c0_i32_0 = arith.constant 0 : i32
    %c0_i32_1 = arith.constant 0 : i32
    return %arg0, %c0_i32, %c0_i32_0 : i32, i32, i32
  }
}

</mosaic_0001>

<llo_original>
// kernel: tpu_custom_call.1
$region0: #{tpu_custom_call.1}
  #allocation0 [shape = 'u32[]', space=smem, size = 0x4, offset = 0x4, fixed_abs, tag = 'smem constant byte address 0x4 - core index']
  #allocation1 [shape = 'u32[144,128]{1,0:T(1,128)}', space=vmem, size = 0x12000, scoped, tag = 'internal scratch']
  %s0 = inlined_call_operand.hbm [shape: f32[2,8,256], index: 0, kind: input, shape index: {}]
  %s1 = inlined_call_operand.hbm [shape: bf16[4,8,72], index: 1, kind: input, shape index: {}]
  %s2 = inlined_call_operand.hbm [shape: f32[72,256], index: 2, kind: input, shape index: {}]
  %s3 = inlined_call_operand.hbm [shape: f32[2,8,256], index: 3, kind: output, shape index: {}]
  %s4 = sld [smem:[#allocation0]]
  $region57: #{tpu_custom_call.1} parent=0
    _
  %s6 = ssub.s32 1, %s4
  %s7 = scalar_select 0, %s6, %s4
  $region1: #{tpu_custom_call.1} parent=0
    #allocation2 [shape = 'u8[16384]{0}', space=vmem, size = 0x4000, scoped, tag = 'input window, operand 0']
    #allocation3 [shape = 's32[2]{0}', space=sflag, size = 0x8, scoped, tag = 'scoped memory for tpu_custom_call.1']
    #allocation4 [shape = 's32[2]{0}', space=sflag, size = 0x8, scoped, tag = 'scoped memory for tpu_custom_call.1']
    #allocation5 [shape = 'u8[8192]{0}', space=vmem, size = 0x2000, scoped, tag = 'input window, operand 1, single buffered']
    #allocation6 [shape = 's32[1]{0}', space=sflag, size = 0x4, scoped, tag = 'scoped memory for tpu_custom_call.1']
    #allocation7 [shape = 'u8[73728]{0}', space=vmem, size = 0x12000, scoped, tag = 'input window, operand 2, single buffered']
    #allocation8 [shape = 'u8[16384]{0}', space=vmem, size = 0x4000, scoped, tag = 'output window, operand 0']
    %8 = vsyncpa [#allocation3], 0
    %s9 = scalar_lea.sflag [#allocation3], 1
    %10 = vsyncpa %s9, 0
    %11 = vsyncpa [#allocation6], 0
    %12 = vsyncpa [#allocation4], 0
    %s13 = scalar_lea.sflag [#allocation4], 1
    %14 = vsyncpa %s13, 0
    loop: start=0, step=1, limit=4
    $region2: #{tpu_custom_call.1} parent=1 // loop_pre_header
      _
    $region3: #{tpu_custom_call.1} parent=1 // loop_header
      %s16 = sphi 0, %s20
      %p17 = scmp.ge.s32.totalorder %s16, 4
      %s26 = sphi 0, %s28
      %s29 = sphi 0, %s26
      %s30 = sphi 0, %s29
      %s46 = sphi 0, %s30
      %s50 = sphi 0, %s50
      %s52 = sphi 0, %s50
      %s53 = sphi 0, %s52
      %s67 = sphi 0, %s53
      %s71 = sphi 0, %s71
      %s73 = sphi 0, %s71
      %s74 = sphi 0, %s73
      %s88 = sphi 0, %s74
      %s94 = sphi 0, %s96
      %s97 = sphi 0, %s94
      %s98 = sphi 0, %s97
      %s114 = sphi 0, %s98
    $region4: #{tpu_custom_call.1} parent=1 // loop_header_branch
      %19 = sbr.rel (%p17) target = $region8
    $region5: #{tpu_custom_call.1} parent=1 // loop_body
      %s21 = ssub.s32 %s16, 1
      %s22 = ssub.s32 %s16, 2
      %s23 = sadd.s32 %s16, 1
      %s24 = ssub.s32 %s16, %s23
      %p25 = scmp.eq.s32.totalorder %s24, 0
      %s27 = sadd.s32 %s26, 1
      %s28 = scalar_select %p25, %s26, %s27
      %p31 = pneg %p25
      %p32 = scmp.eq.s32.totalorder %s16, 1
      %p33 = por %p31, %p32
      %p34 = scmp.ne.s32.totalorder %s26, %s29
      %p35 = scmp.eq.s32.totalorder %s16, 0
      %p36 = por %p34, %p35
      %p37 = scmp.ne.s32.totalorder %s26, %s29
      %p38 = scmp.eq.s32.totalorder %s21, 1
      %p39 = por %p37, %p38
      %p40 = scmp.ne.s32.totalorder %s29, %s30
      %p41 = scmp.eq.s32.totalorder %s21, 0
      %p42 = por %p40, %p41
      %p43 = scmp.ne.s32.totalorder %s29, %s30
      %p44 = scmp.eq.s32.totalorder %s22, 1
      %p45 = por %p43, %p44
      %p47 = scmp.ne.s32.totalorder %s30, %s46
      %p48 = scmp.eq.s32.totalorder %s22, 0
      %p49 = por %p47, %p48
      %s51 = sadd.s32 %s50, 1
      %p54 = scmp.eq.s32.totalorder %s16, 1
      %p55 = scmp.ne.s32.totalorder %s50, %s52
      %p56 = scmp.eq.s32.totalorder %s16, 0
      %p57 = por %p55, %p56
      %p58 = scmp.ne.s32.totalorder %s50, %s52
      %p59 = scmp.eq.s32.totalorder %s21, 1
      %p60 = por %p58, %p59
      %p61 = scmp.ne.s32.totalorder %s52, %s53
      %p62 = scmp.eq.s32.totalorder %s21, 0
      %p63 = por %p61, %p62
      %p64 = scmp.ne.s32.totalorder %s52, %s53
      %p65 = scmp.eq.s32.totalorder %s22, 1
      %p66 = por %p64, %p65
      %p68 = scmp.ne.s32.totalorder %s53, %s67
      %p69 = scmp.eq.s32.totalorder %s22, 0
      %p70 = por %p68, %p69
      %s72 = sadd.s32 %s71, 1
      %p75 = scmp.eq.s32.totalorder %s16, 1
      %p76 = scmp.ne.s32.totalorder %s71, %s73
      %p77 = scmp.eq.s32.totalorder %s16, 0
      %p78 = por %p76, %p77
      %p79 = scmp.ne.s32.totalorder %s71, %s73
      %p80 = scmp.eq.s32.totalorder %s21, 1
      %p81 = por %p79, %p80
      %p82 = scmp.ne.s32.totalorder %s73, %s74
      %p83 = scmp.eq.s32.totalorder %s21, 0
      %p84 = por %p82, %p83
      %p85 = scmp.ne.s32.totalorder %s73, %s74
      %p86 = scmp.eq.s32.totalorder %s22, 1
      %p87 = por %p85, %p86
      %p89 = scmp.ne.s32.totalorder %s74, %s88
      %p90 = scmp.eq.s32.totalorder %s22, 0
      %p91 = por %p89, %p90
      %s92 = ssub.s32 %s16, %s23
      %p93 = scmp.eq.s32.totalorder %s92, 0
      %s95 = sadd.s32 %s94, 1
      %s96 = scalar_select %p93, %s94, %s95
      %p99 = pneg %p93
      %p100 = scmp.eq.s32.totalorder %s16, 1
      %p101 = por %p99, %p100
      %p102 = scmp.ne.s32.totalorder %s94, %s97
      %p103 = scmp.eq.s32.totalorder %s16, 0
      %p104 = por %p102, %p103
      %p105 = scmp.ne.s32.totalorder %s94, %s97
      %p106 = scmp.eq.s32.totalorder %s21, 1
      %p107 = por %p105, %p106
      %p108 = scmp.ne.s32.totalorder %s97, %s98
      %p109 = scmp.eq.s32.totalorder %s21, 0
      %p110 = por %p108, %p109
      %p111 = scmp.ne.s32.totalorder %s97, %s98
      %p112 = scmp.eq.s32.totalorder %s22, 1
      %p113 = por %p111, %p112
      %p115 = scmp.ne.s32.totalorder %s98, %s114
      %p116 = scmp.eq.s32.totalorder %s22, 0
      %p117 = por %p115, %p116
      %p118 = scmp.le.s32.totalorder 1, %s16
      %p119 = scmp.lt.s32.totalorder %s16, 3
      %p120 = pnand %p118, %p119
      %p121 = pneg %p120
      // Predicated region
      $region9: #{tpu_custom_call.1} parent=5 // pred_check
        _
      $region10: #{tpu_custom_call.1} parent=5 // pred_check_branch
        %123 = sbr.rel (%p120) target = $region12
      $region11: #{tpu_custom_call.1} parent=5 // pred_region
        %s124 = ssub.s32 %s16, 1
        // Predicated region
        $region13: #{tpu_custom_call.1} parent=11 // pred_check
          %p125 = pneg %p63
        $region14: #{tpu_custom_call.1} parent=11 // pred_check_branch
          %127 = sbr.rel (%p125) target = $region16
        $region15: #{tpu_custom_call.1} parent=11 // pred_region
          %s129 = ssub.s32 256, 256
          %130 = vsyncadd [#allocation6], %s129
          %s131 = sshll.u32 [#allocation5], 4
          %s132 = int_to_ptr.vmem [resolvable:$true] %s131
          %137 = dma.hbm_to_vmem [thread:$0]  %s1, 256, %s132, [#allocation6], 64, 64, 4
        $region16: #{tpu_custom_call.1} parent=11 // pred_fallthru
          _
        // Predicated region
        $region17: #{tpu_custom_call.1} parent=11 // pred_check
          %p138 = pneg %p84
        $region18: #{tpu_custom_call.1} parent=11 // pred_check_branch
          %140 = sbr.rel (%p138) target = $region20
        $region19: #{tpu_custom_call.1} parent=11 // pred_region
          %s142 = ssub.s32 2304, 2304
          %143 = vsyncadd [#allocation6], %s142
          %s144 = sshll.u32 [#allocation7], 4
          %s145 = int_to_ptr.vmem [resolvable:$true] %s144
          %150 = dma.hbm_to_vmem [thread:$0]  %s2, 2304, %s145, [#allocation6], 256, 256, 16
        $region20: #{tpu_custom_call.1} parent=11 // pred_fallthru
          _
      $region12: #{tpu_custom_call.1} parent=5 // pred_fallthru
        _
      %p151 = scmp.lt.s32.totalorder %s16, 2
      // Predicated region
      $region21: #{tpu_custom_call.1} parent=5 // pred_check
        %p152 = pneg %p151
      $region22: #{tpu_custom_call.1} parent=5 // pred_check_branch
        %154 = sbr.rel (%p152) target = $region24
      $region23: #{tpu_custom_call.1} parent=5 // pred_region
        // Predicated region
        $region25: #{tpu_custom_call.1} parent=23 // pred_check
          %p155 = pneg %p36
        $region26: #{tpu_custom_call.1} parent=23 // pred_check_branch
          %157 = sbr.rel (%p155) target = $region28
        $region27: #{tpu_custom_call.1} parent=23 // pred_region
          %s158 = sand.u32 %s26, 1
          %s159 = scalar_lea.sflag [#allocation3], %s158
          %s160 = sand.u32 %s26, 1
          %s161 = smul.addr %s160, 16
          %s162 = scalar_lea.vmem [#allocation2], %s161
          %s164 = ssub.s32 256, 256
          %165 = vsyncadd %s159, %s164
          %s166 = smul.addr %s16, 2
          %s167 = smul.addr %s166, 128
          %s168 = scalar_lea.hbm %s0, %s167
          %s170 = sshll.u32 %s162, 4
          %s171 = int_to_ptr.vmem [resolvable:$true] %s170
          %173 = dma.hbm_to_vmem [thread:$0]  %s168, 256, %s171, %s159
        $region28: #{tpu_custom_call.1} parent=23 // pred_fallthru
          _
      $region24: #{tpu_custom_call.1} parent=5 // pred_fallthru
        _
      %p174 = scmp.le.s32.totalorder 1, %s16
      %p175 = scmp.lt.s32.totalorder %s16, 3
      %p176 = pnand %p174, %p175
      %p177 = pneg %p176
      // Predicated region
      $region29: #{tpu_custom_call.1} parent=5 // pred_check
        _
      $region30: #{tpu_custom_call.1} parent=5 // pred_check_branch
        %179 = sbr.rel (%p176) target = $region32
      $region31: #{tpu_custom_call.1} parent=5 // pred_region
        %s180 = ssub.s32 %s16, 1
        %s181 = sand.u32 %s29, 1
        %s182 = scalar_lea.sflag [#allocation3], %s181
        %s183 = sand.u32 %s29, 1
        %s184 = smul.addr %s183, 16
        %s185 = scalar_lea.vmem [#allocation2], %s184
        // Predicated region
        $region33: #{tpu_custom_call.1} parent=31 // pred_check
          %p186 = pneg %p42
        $region34: #{tpu_custom_call.1} parent=31 // pred_check_branch
          %188 = sbr.rel (%p186) target = $region36
        $region35: #{tpu_custom_call.1} parent=31 // pred_region
          %189 = dma.done %s182, 256
        $region36: #{tpu_custom_call.1} parent=31 // pred_fallthru
          _
        // Predicated region
        $region37: #{tpu_custom_call.1} parent=31 // pred_check
          %p190 = pneg %p63
        $region38: #{tpu_custom_call.1} parent=31 // pred_check_branch
          %192 = sbr.rel (%p190) target = $region40
        $region39: #{tpu_custom_call.1} parent=31 // pred_region
          %193 = dma.done [#allocation6], 256
        $region40: #{tpu_custom_call.1} parent=31 // pred_fallthru
          _
        // Predicated region
        $region41: #{tpu_custom_call.1} parent=31 // pred_check
          %p194 = pneg %p84
        $region42: #{tpu_custom_call.1} parent=31 // pred_check_branch
          %196 = sbr.rel (%p194) target = $region44
        $region43: #{tpu_custom_call.1} parent=31 // pred_region
          %197 = dma.done [#allocation6], 2304
        $region44: #{tpu_custom_call.1} parent=31 // pred_fallthru
          _
        %s198 = sand.u32 %s29, 1
        %s199 = scalar_lea.sflag [#allocation3], %s198
        %s200 = sand.u32 %s29, 1
        %s201 = smul.addr %s200, 16
        %s202 = scalar_lea.vmem [#allocation2], %s201
        %p203 = pneg %p42
        %p204 = pneg %p39
        %p205 = pneg %p63
        %p206 = pneg %p60
        %p207 = pneg %p84
        %p208 = pneg %p81
        %p209 = pneg %p110
        %p210 = pneg %p107
        %s211 = sand.u32 %s97, 1
        %s212 = scalar_lea.sflag [#allocation4], %s211
        %s213 = sand.u32 %s97, 1
        %s214 = smul.addr %s213, 16
        %s215 = scalar_lea.vmem [#allocation8], %s214
        %v217 = vld [vmem:[#allocation7] sm:$0xff]
        %v218 = vld [vmem:[#allocation7 + $0x8] sm:$0xff]
        %v219 = vld [vmem:[#allocation7 + $0x10] sm:$0xff]
        %v220 = vld [vmem:[#allocation7 + $0x18] sm:$0xff]
        %v221 = vld [vmem:[#allocation7 + $0x20] sm:$0xff]
        %v222 = vld [vmem:[#allocation7 + $0x28] sm:$0xff]
        %v223 = vld [vmem:[#allocation7 + $0x30] sm:$0xff]
        %v224 = vld [vmem:[#allocation7 + $0x38] sm:$0xff]
        %v225 = vld [vmem:[#allocation7 + $0x40] sm:$0xff]
        %v226 = vld [vmem:[#allocation7 + $0x48] sm:$0xff]
        %v227 = vld [vmem:[#allocation7 + $0x50] sm:$0xff]
        %v228 = vld [vmem:[#allocation7 + $0x58] sm:$0xff]
        %v229 = vld [vmem:[#allocation7 + $0x60] sm:$0xff]
        %v230 = vld [vmem:[#allocation7 + $0x68] sm:$0xff]
        %v231 = vld [vmem:[#allocation7 + $0x70] sm:$0xff]
        %v232 = vld [vmem:[#allocation7 + $0x78] sm:$0xff]
        %v233 = vld [vmem:[#allocation7 + $0x80] sm:$0xff]
        %v234 = vld [vmem:[#allocation7 + $0x88] sm:$0xff]
        %v235 = vld [vmem:[%s185] sm:$0xff]
        %v236 = vld [vmem:[%s185 + $0x8] sm:$0xff]
        %v237 = vmax.f32 %v235, 0.0
        %v238 = vmax.f32 %v236, 0.0
        %239 = vrot.lane.b32.xlu0 %v237, 17
        %v240 = vpop.permute.xlu0 %239
        %241 = vrot.lane.b32.xlu0 %v238, 17
        %v242 = vpop.permute.xlu0 %241
        %v243 = vlaneseq
        %v244 = vand.u32 %v243, 127
        %vm245 = vcmp.lt.s32.totalorder %v244, 17
        %v246 = vsel %vm245, %v240, %v242
        %v247 = vsel %vm245, %v242, %v240
        %248 = vrot.lane.b32.xlu0 %v237, 16
        %v249 = vpop.permute.xlu0 %248
        %250 = vrot.lane.b32.xlu0 %v238, 16
        %v251 = vpop.permute.xlu0 %250
        %vm252 = vcmp.lt.s32.totalorder %v244, 16
        %v253 = vsel %vm252, %v249, %v251
        %v254 = vsel %vm252, %v251, %v249
        %255 = vrot.lane.b32.xlu0 %v237, 15
        %v256 = vpop.permute.xlu0 %255
        %257 = vrot.lane.b32.xlu0 %v238, 15
        %v258 = vpop.permute.xlu0 %257
        %vm259 = vcmp.lt.s32.totalorder %v244, 15
        %v260 = vsel %vm259, %v256, %v258
        %v261 = vsel %vm259, %v258, %v256
        %262 = vrot.lane.b32.xlu0 %v237, 1
        %v263 = vpop.permute.xlu0 %262
        %264 = vrot.lane.b32.xlu0 %v238, 1
        %v265 = vpop.permute.xlu0 %264
        %vm266 = vcmp.lt.s32.totalorder %v244, 1
        %v267 = vsel %vm266, %v263, %v265
        %v268 = vsel %vm266, %v265, %v263
        %269 = vrot.lane.b32.xlu0 %v237, 127
        %v270 = vpop.permute.xlu0 %269
        %271 = vrot.lane.b32.xlu0 %v238, 127
        %v272 = vpop.permute.xlu0 %271
        %vm273 = vcmp.lt.s32.totalorder %v244, 127
        %v274 = vsel %vm273, %v270, %v272
        %v275 = vsel %vm273, %v272, %v270
        %276 = vrot.lane.b32.xlu0 %v237, 113
        %v277 = vpop.permute.xlu0 %276
        %278 = vrot.lane.b32.xlu0 %v238, 113
        %v279 = vpop.permute.xlu0 %278
        %vm280 = vcmp.lt.s32.totalorder %v244, 113
        %v281 = vsel %vm280, %v277, %v279
        %v282 = vsel %vm280, %v279, %v277
        %283 = vrot.lane.b32.xlu0 %v237, 112
        %v284 = vpop.permute.xlu0 %283
        %285 = vrot.lane.b32.xlu0 %v238, 112
        %v286 = vpop.permute.xlu0 %285
        %vm287 = vcmp.lt.s32.totalorder %v244, 112
        %v288 = vsel %vm287, %v284, %v286
        %v289 = vsel %vm287, %v286, %v284
        %290 = vrot.lane.b32.xlu0 %v237, 111
        %v291 = vpop.permute.xlu0 %290
        %292 = vrot.lane.b32.xlu0 %v238, 111
        %v293 = vpop.permute.xlu0 %292
        %vm294 = vcmp.lt.s32.totalorder %v244, 111
        %v295 = vsel %vm294, %v291, %v293
        %v296 = vsel %vm294, %v293, %v291
        %v297 = vmul.f32 %v247, %v217
        %v298 = vmul.f32 %v246, %v218
        %v299 = vmul.f32 %v254, %v219
        %v300 = vmul.f32 %v253, %v220
        %v301 = vmul.f32 %v261, %v221
        %v302 = vmul.f32 %v260, %v222
        %v303 = vmul.f32 %v268, %v223
        %v304 = vmul.f32 %v267, %v224
        %v305 = vmul.f32 %v237, %v225
        %v306 = vmul.f32 %v238, %v226
        %v307 = vmul.f32 %v274, %v227
        %v308 = vmul.f32 %v275, %v228
        %v309 = vmul.f32 %v281, %v229
        %v310 = vmul.f32 %v282, %v230
        %v311 = vmul.f32 %v288, %v231
        %v312 = vmul.f32 %v289, %v232
        %v313 = vmul.f32 %v295, %v233
        %v314 = vmul.f32 %v296, %v234
        %v315 = vpack.c.bf16 %v299, %v297
        %v316 = vpack.c.bf16 %v300, %v298
        %v317 = vpack.c.bf16 %v303, %v301
        %v318 = vpack.c.bf16 %v304, %v302
        %v319 = vpack.c.bf16 %v307, %v305
        %v320 = vpack.c.bf16 %v308, %v306
        %v321 = vpack.c.bf16 %v311, %v309
        %v322 = vpack.c.bf16 %v312, %v310
        %v323 = vpack.c.bf16 %v313, %v313
        %v324 = vpack.c.bf16 %v314, %v314
        %v325 = vld [vmem:[#allocation5] sm:$0xf]
        %vm326 = vcmask 588800
        %v328 = vsel %vm326, %v325, 0
        %vm330 = vcmask 1043456
        %v332 = vsel %vm330, %v323, 0
        %v335 = vsel %vm330, %v324, 0
        %337 = vmatprep.subr.bf16.mxu0 0
        %338 = vmatpush1.bf16.msra.mxu0 0
        %339 = vmatprep.subr.bf16.mxu0 0
        %340 = vmatpush1.bf16.msra.mxu0 0
        %341 = vmatprep.subr.bf16.mxu0 0
        %342 = vmatpush1.bf16.msra.mxu0 0
        %343 = vmatprep.subr.bf16.mxu0 %v335
        %344 = vmatpush1.bf16.msra.mxu0 %v332
        %345 = vmatprep.subr.bf16.mxu0 %v322
        %346 = vmatpush1.bf16.msra.mxu0 %v321
        %347 = vmatprep.subr.bf16.mxu0 %v320
        %348 = vmatpush1.bf16.msra.mxu0 %v319
        %349 = vmatprep.subr.bf16.mxu0 %v318
        %350 = vmatpush1.bf16.msra.mxu0 %v317
        %351 = vmatprep.subr.bf16.mxu0 %v316
        %352 = vmatpush1.bf16.msra.mxu0 %v315
        %353 = vmatprep.subr.bf16.mxu0 0
        %354 = vmatpush2.bf16.msra.mxu0 0
        %355 = vmatprep.subr.bf16.mxu0 0
        %356 = vmatpush2.bf16.msra.mxu0 0
        %357 = vmatprep.subr.bf16.mxu0 0
        %358 = vmatpush2.bf16.msra.mxu0 0
        %359 = vmatprep.subr.bf16.mxu0 0
        %360 = vmatpush2.bf16.msra.mxu0 0
        %361 = vmatprep.subr.bf16.mxu0 0
        %362 = vmatpush2.bf16.msra.mxu0 0
        %363 = vmatprep.subr.bf16.mxu0 0
        %364 = vmatpush2.bf16.msra.mxu0 0
        %365 = vmatprep.subr.bf16.mxu0 0
        %366 = vmatpush2.bf16.msra.mxu0 0
        %367 = vmatprep.subr.bf16.mxu0 0
        %368 = vmatpush2.bf16.msra.mxu0 0
        %369 = vmatprep.mubr.bf16.mxu0 0
        %370 = vmatmul.mubr.bf16.gmra.mxu0 %v328
        %v371 = vpop.f32.mrf.mxu0
        %v372 = vadd.f32 0.0, %v371
        %v373 = vpop.f32.mrf.mxu0
        %v374 = vadd.f32 0.0, %v373
        %v375 = vpop.f32.mrf.mxu0
        %v376 = vpop.f32.mrf.mxu0
        %377 = vdwg.mxu0
        %v378 = vmax.f32 %v372, 0.0
        %v379 = vmax.f32 %v374, 0.0
        %380 = vrot.lane.b32.xlu0 %v378, 17
        %v381 = vpop.permute.xlu0 %380
        %382 = vrot.lane.b32.xlu0 %v379, 17
        %v383 = vpop.permute.xlu0 %382
        %v384 = vsel %vm245, %v381, %v383
        %v385 = vsel %vm245, %v383, %v381
        %386 = vrot.lane.b32.xlu0 %v378, 16
        %v387 = vpop.permute.xlu0 %386
        %388 = vrot.lane.b32.xlu0 %v379, 16
        %v389 = vpop.permute.xlu0 %388
        %v390 = vsel %vm252, %v387, %v389
        %v391 = vsel %vm252, %v389, %v387
        %392 = vrot.lane.b32.xlu0 %v378, 15
        %v393 = vpop.permute.xlu0 %392
        %394 = vrot.lane.b32.xlu0 %v379, 15
        %v395 = vpop.permute.xlu0 %394
        %v396 = vsel %vm259, %v393, %v395
        %v397 = vsel %vm259, %v395, %v393
        %398 = vrot.lane.b32.xlu0 %v378, 1
        %v399 = vpop.permute.xlu0 %398
        %400 = vrot.lane.b32.xlu0 %v379, 1
        %v401 = vpop.permute.xlu0 %400
        %v402 = vsel %vm266, %v399, %v401
        %v403 = vsel %vm266, %v401, %v399
        %404 = vrot.lane.b32.xlu0 %v378, 127
        %v405 = vpop.permute.xlu0 %404
        %406 = vrot.lane.b32.xlu0 %v379, 127
        %v407 = vpop.permute.xlu0 %406
        %v408 = vsel %vm273, %v405, %v407
        %v409 = vsel %vm273, %v407, %v405
        %410 = vrot.lane.b32.xlu0 %v378, 113
        %v411 = vpop.permute.xlu0 %410
        %412 = vrot.lane.b32.xlu0 %v379, 113
        %v413 = vpop.permute.xlu0 %412
        %v414 = vsel %vm280, %v411, %v413
        %v415 = vsel %vm280, %v413, %v411
        %416 = vrot.lane.b32.xlu0 %v378, 112
        %v417 = vpop.permute.xlu0 %416
        %418 = vrot.lane.b32.xlu0 %v379, 112
        %v419 = vpop.permute.xlu0 %418
        %v420 = vsel %vm287, %v417, %v419
        %v421 = vsel %vm287, %v419, %v417
        %422 = vrot.lane.b32.xlu0 %v378, 111
        %v423 = vpop.permute.xlu0 %422
        %424 = vrot.lane.b32.xlu0 %v379, 111
        %v425 = vpop.permute.xlu0 %424
        %v426 = vsel %vm294, %v423, %v425
        %v427 = vsel %vm294, %v425, %v423
        %v428 = vmul.f32 %v385, %v217
        %v429 = vmul.f32 %v384, %v218
        %v430 = vmul.f32 %v391, %v219
        %v431 = vmul.f32 %v390, %v220
        %v432 = vmul.f32 %v397, %v221
        %v433 = vmul.f32 %v396, %v222
        %v434 = vmul.f32 %v403, %v223
        %v435 = vmul.f32 %v402, %v224
        %v436 = vmul.f32 %v378, %v225
        %v437 = vmul.f32 %v379, %v226
        %v438 = vmul.f32 %v408, %v227
        %v439 = vmul.f32 %v409, %v228
        %v440 = vmul.f32 %v414, %v229
        %v441 = vmul.f32 %v415, %v230
        %v442 = vmul.f32 %v420, %v231
        %v443 = vmul.f32 %v421, %v232
        %v444 = vmul.f32 %v426, %v233
        %v445 = vmul.f32 %v427, %v234
        %v446 = vpack.c.bf16 %v430, %v428
        %v447 = vpack.c.bf16 %v431, %v429
        %v448 = vpack.c.bf16 %v434, %v432
        %v449 = vpack.c.bf16 %v435, %v433
        %v450 = vpack.c.bf16 %v438, %v436
        %v451 = vpack.c.bf16 %v439, %v437
        %v452 = vpack.c.bf16 %v442, %v440
        %v453 = vpack.c.bf16 %v443, %v441
        %v454 = vpack.c.bf16 %v444, %v444
        %v455 = vpack.c.bf16 %v445, %v445
        %s456 = scalar_lea.vmem [#allocation5], 4
        %v457 = vld [vmem:[%s456] sm:$0xf]
        %v459 = vsel %vm326, %v457, 0
        %v462 = vsel %vm330, %v454, 0
        %v465 = vsel %vm330, %v455, 0
        %467 = vmatprep.subr.bf16.mxu0 0
        %468 = vmatpush1.bf16.msra.mxu0 0
        %469 = vmatprep.subr.bf16.mxu0 0
        %470 = vmatpush1.bf16.msra.mxu0 0
        %471 = vmatprep.subr.bf16.mxu0 0
        %472 = vmatpush1.bf16.msra.mxu0 0
        %473 = vmatprep.subr.bf16.mxu0 %v465
        %474 = vmatpush1.bf16.msra.mxu0 %v462
        %475 = vmatprep.subr.bf16.mxu0 %v453
        %476 = vmatpush1.bf16.msra.mxu0 %v452
        %477 = vmatprep.subr.bf16.mxu0 %v451
        %478 = vmatpush1.bf16.msra.mxu0 %v450
        %479 = vmatprep.subr.bf16.mxu0 %v449
        %480 = vmatpush1.bf16.msra.mxu0 %v448
        %481 = vmatprep.subr.bf16.mxu0 %v447
        %482 = vmatpush1.bf16.msra.mxu0 %v446
        %483 = vmatprep.subr.bf16.mxu0 0
        %484 = vmatpush2.bf16.msra.mxu0 0
        %485 = vmatprep.subr.bf16.mxu0 0
        %486 = vmatpush2.bf16.msra.mxu0 0
        %487 = vmatprep.subr.bf16.mxu0 0
        %488 = vmatpush2.bf16.msra.mxu0 0
        %489 = vmatprep.subr.bf16.mxu0 0
        %490 = vmatpush2.bf16.msra.mxu0 0
        %491 = vmatprep.subr.bf16.mxu0 0
        %492 = vmatpush2.bf16.msra.mxu0 0
        %493 = vmatprep.subr.bf16.mxu0 0
        %494 = vmatpush2.bf16.msra.mxu0 0
        %495 = vmatprep.subr.bf16.mxu0 0
        %496 = vmatpush2.bf16.msra.mxu0 0
        %497 = vmatprep.subr.bf16.mxu0 0
        %498 = vmatpush2.bf16.msra.mxu0 0
        %499 = vmatprep.mubr.bf16.mxu0 0
        %500 = vmatmul.mubr.bf16.gmra.mxu0 %v459
        %v501 = vpop.f32.mrf.mxu0
        %v502 = vadd.f32 %v235, %v501
        %v503 = vpop.f32.mrf.mxu0
        %v504 = vadd.f32 %v236, %v503
        %v505 = vpop.f32.mrf.mxu0
        %v506 = vpop.f32.mrf.mxu0
        %507 = vdwg.mxu0
        %v508 = vmax.f32 %v502, 0.0
        %v509 = vmax.f32 %v504, 0.0
        %510 = vrot.lane.b32.xlu0 %v508, 17
        %v511 = vpop.permute.xlu0 %510
        %512 = vrot.lane.b32.xlu0 %v509, 17
        %v513 = vpop.permute.xlu0 %512
        %v514 = vsel %vm245, %v511, %v513
        %v515 = vsel %vm245, %v513, %v511
        %516 = vrot.lane.b32.xlu0 %v508, 16
        %v517 = vpop.permute.xlu0 %516
        %518 = vrot.lane.b32.xlu0 %v509, 16
        %v519 = vpop.permute.xlu0 %518
        %v520 = vsel %vm252, %v517, %v519
        %v521 = vsel %vm252, %v519, %v517
        %522 = vrot.lane.b32.xlu0 %v508, 15
        %v523 = vpop.permute.xlu0 %522
        %524 = vrot.lane.b32.xlu0 %v509, 15
        %v525 = vpop.permute.xlu0 %524
        %v526 = vsel %vm259, %v523, %v525
        %v527 = vsel %vm259, %v525, %v523
        %528 = vrot.lane.b32.xlu0 %v508, 1
        %v529 = vpop.permute.xlu0 %528
        %530 = vrot.lane.b32.xlu0 %v509, 1
        %v531 = vpop.permute.xlu0 %530
        %v532 = vsel %vm266, %v529, %v531
        %v533 = vsel %vm266, %v531, %v529
        %534 = vrot.lane.b32.xlu0 %v508, 127
        %v535 = vpop.permute.xlu0 %534
        %536 = vrot.lane.b32.xlu0 %v509, 127
        %v537 = vpop.permute.xlu0 %536
        %v538 = vsel %vm273, %v535, %v537
        %v539 = vsel %vm273, %v537, %v535
        %540 = vrot.lane.b32.xlu0 %v508, 113
        %v541 = vpop.permute.xlu0 %540
        %542 = vrot.lane.b32.xlu0 %v509, 113
        %v543 = vpop.permute.xlu0 %542
        %v544 = vsel %vm280, %v541, %v543
        %v545 = vsel %vm280, %v543, %v541
        %546 = vrot.lane.b32.xlu0 %v508, 112
        %v547 = vpop.permute.xlu0 %546
        %548 = vrot.lane.b32.xlu0 %v509, 112
        %v549 = vpop.permute.xlu0 %548
        %v550 = vsel %vm287, %v547, %v549
        %v551 = vsel %vm287, %v549, %v547
        %552 = vrot.lane.b32.xlu0 %v508, 111
        %v553 = vpop.permute.xlu0 %552
        %554 = vrot.lane.b32.xlu0 %v509, 111
        %v555 = vpop.permute.xlu0 %554
        %v556 = vsel %vm294, %v553, %v555
        %v557 = vsel %vm294, %v555, %v553
        %v558 = vmul.f32 %v515, %v217
        %v559 = vmul.f32 %v514, %v218
        %v560 = vmul.f32 %v521, %v219
        %v561 = vmul.f32 %v520, %v220
        %v562 = vmul.f32 %v527, %v221
        %v563 = vmul.f32 %v526, %v222
        %v564 = vmul.f32 %v533, %v223
        %v565 = vmul.f32 %v532, %v224
        %v566 = vmul.f32 %v508, %v225
        %v567 = vmul.f32 %v509, %v226
        %v568 = vmul.f32 %v538, %v227
        %v569 = vmul.f32 %v539, %v228
        %v570 = vmul.f32 %v544, %v229
        %v571 = vmul.f32 %v545, %v230
        %v572 = vmul.f32 %v550, %v231
        %v573 = vmul.f32 %v551, %v232
        %v574 = vmul.f32 %v556, %v233
        %v575 = vmul.f32 %v557, %v234
        %v576 = vpack.c.bf16 %v560, %v558
        %v577 = vpack.c.bf16 %v561, %v559
        %v578 = vpack.c.bf16 %v564, %v562
        %v579 = vpack.c.bf16 %v565, %v563
        %v580 = vpack.c.bf16 %v568, %v566
        %v581 = vpack.c.bf16 %v569, %v567
        %v582 = vpack.c.bf16 %v572, %v570
        %v583 = vpack.c.bf16 %v573, %v571
        %v584 = vpack.c.bf16 %v574, %v574
        %v585 = vpack.c.bf16 %v575, %v575
        %s586 = scalar_lea.vmem [#allocation5], 8
        %v587 = vld [vmem:[%s586] sm:$0xf]
        %v589 = vsel %vm326, %v587, 0
        %v592 = vsel %vm330, %v584, 0
        %v595 = vsel %vm330, %v585, 0
        %597 = vmatprep.subr.bf16.mxu0 0
        %598 = vmatpush1.bf16.msra.mxu0 0
        %599 = vmatprep.subr.bf16.mxu0 0
        %600 = vmatpush1.bf16.msra.mxu0 0
        %601 = vmatprep.subr.bf16.mxu0 0
        %602 = vmatpush1.bf16.msra.mxu0 0
        %603 = vmatprep.subr.bf16.mxu0 %v595
        %604 = vmatpush1.bf16.msra.mxu0 %v592
        %605 = vmatprep.subr.bf16.mxu0 %v583
        %606 = vmatpush1.bf16.msra.mxu0 %v582
        %607 = vmatprep.subr.bf16.mxu0 %v581
        %608 = vmatpush1.bf16.msra.mxu0 %v580
        %609 = vmatprep.subr.bf16.mxu0 %v579
        %610 = vmatpush1.bf16.msra.mxu0 %v578
        %611 = vmatprep.subr.bf16.mxu0 %v577
        %612 = vmatpush1.bf16.msra.mxu0 %v576
        %613 = vmatprep.subr.bf16.mxu0 0
        %614 = vmatpush2.bf16.msra.mxu0 0
        %615 = vmatprep.subr.bf16.mxu0 0
        %616 = vmatpush2.bf16.msra.mxu0 0
        %617 = vmatprep.subr.bf16.mxu0 0
        %618 = vmatpush2.bf16.msra.mxu0 0
        %619 = vmatprep.subr.bf16.mxu0 0
        %620 = vmatpush2.bf16.msra.mxu0 0
        %621 = vmatprep.subr.bf16.mxu0 0
        %622 = vmatpush2.bf16.msra.mxu0 0
        %623 = vmatprep.subr.bf16.mxu0 0
        %624 = vmatpush2.bf16.msra.mxu0 0
        %625 = vmatprep.subr.bf16.mxu0 0
        %626 = vmatpush2.bf16.msra.mxu0 0
        %627 = vmatprep.subr.bf16.mxu0 0
        %628 = vmatpush2.bf16.msra.mxu0 0
        %629 = vmatprep.mubr.bf16.mxu0 0
        %630 = vmatmul.mubr.bf16.gmra.mxu0 %v589
        %v631 = vpop.f32.mrf.mxu0
        %v632 = vadd.f32 0.0, %v631
        %v633 = vpop.f32.mrf.mxu0
        %v634 = vadd.f32 0.0, %v633
        %v635 = vpop.f32.mrf.mxu0
        %v636 = vpop.f32.mrf.mxu0
        %637 = vdwg.mxu0
        %v638 = vmax.f32 %v632, 0.0
        %v639 = vmax.f32 %v634, 0.0
        %640 = vrot.lane.b32.xlu0 %v638, 17
        %v641 = vpop.permute.xlu0 %640
        %642 = vrot.lane.b32.xlu0 %v639, 17
        %v643 = vpop.permute.xlu0 %642
        %v644 = vsel %vm245, %v641, %v643
        %v645 = vsel %vm245, %v643, %v641
        %646 = vrot.lane.b32.xlu0 %v638, 16
        %v647 = vpop.permute.xlu0 %646
        %648 = vrot.lane.b32.xlu0 %v639, 16
        %v649 = vpop.permute.xlu0 %648
        %v650 = vsel %vm252, %v647, %v649
        %v651 = vsel %vm252, %v649, %v647
        %652 = vrot.lane.b32.xlu0 %v638, 15
        %v653 = vpop.permute.xlu0 %652
        %654 = vrot.lane.b32.xlu0 %v639, 15
        %v655 = vpop.permute.xlu0 %654
        %v656 = vsel %vm259, %v653, %v655
        %v657 = vsel %vm259, %v655, %v653
        %658 = vrot.lane.b32.xlu0 %v638, 1
        %v659 = vpop.permute.xlu0 %658
        %660 = vrot.lane.b32.xlu0 %v639, 1
        %v661 = vpop.permute.xlu0 %660
        %v662 = vsel %vm266, %v659, %v661
        %v663 = vsel %vm266, %v661, %v659
        %664 = vrot.lane.b32.xlu0 %v638, 127
        %v665 = vpop.permute.xlu0 %664
        %666 = vrot.lane.b32.xlu0 %v639, 127
        %v667 = vpop.permute.xlu0 %666
        %v668 = vsel %vm273, %v665, %v667
        %v669 = vsel %vm273, %v667, %v665
        %670 = vrot.lane.b32.xlu0 %v638, 113
        %v671 = vpop.permute.xlu0 %670
        %672 = vrot.lane.b32.xlu0 %v639, 113
        %v673 = vpop.permute.xlu0 %672
        %v674 = vsel %vm280, %v671, %v673
        %v675 = vsel %vm280, %v673, %v671
        %676 = vrot.lane.b32.xlu0 %v638, 112
        %v677 = vpop.permute.xlu0 %676
        %678 = vrot.lane.b32.xlu0 %v639, 112
        %v679 = vpop.permute.xlu0 %678
        %v680 = vsel %vm287, %v677, %v679
        %v681 = vsel %vm287, %v679, %v677
        %682 = vrot.lane.b32.xlu0 %v638, 111
        %v683 = vpop.permute.xlu0 %682
        %684 = vrot.lane.b32.xlu0 %v639, 111
        %v685 = vpop.permute.xlu0 %684
        %v686 = vsel %vm294, %v683, %v685
        %v687 = vsel %vm294, %v685, %v683
        %v688 = vmul.f32 %v645, %v217
        %v689 = vmul.f32 %v644, %v218
        %v690 = vmul.f32 %v651, %v219
        %v691 = vmul.f32 %v650, %v220
        %v692 = vmul.f32 %v657, %v221
        %v693 = vmul.f32 %v656, %v222
        %v694 = vmul.f32 %v663, %v223
        %v695 = vmul.f32 %v662, %v224
        %v696 = vmul.f32 %v638, %v225
        %v697 = vmul.f32 %v639, %v226
        %v698 = vmul.f32 %v668, %v227
        %v699 = vmul.f32 %v669, %v228
        %v700 = vmul.f32 %v674, %v229
        %v701 = vmul.f32 %v675, %v230
        %v702 = vmul.f32 %v680, %v231
        %v703 = vmul.f32 %v681, %v232
        %v704 = vmul.f32 %v686, %v233
        %v705 = vmul.f32 %v687, %v234
        %v706 = vpack.c.bf16 %v690, %v688
        %v707 = vpack.c.bf16 %v691, %v689
        %v708 = vpack.c.bf16 %v694, %v692
        %v709 = vpack.c.bf16 %v695, %v693
        %v710 = vpack.c.bf16 %v698, %v696
        %v711 = vpack.c.bf16 %v699, %v697
        %v712 = vpack.c.bf16 %v702, %v700
        %v713 = vpack.c.bf16 %v703, %v701
        %v714 = vpack.c.bf16 %v704, %v704
        %v715 = vpack.c.bf16 %v705, %v705
        %s716 = scalar_lea.vmem [#allocation5], 12
        %v717 = vld [vmem:[%s716] sm:$0xf]
        %v719 = vsel %vm326, %v717, 0
        %v722 = vsel %vm330, %v714, 0
        %v725 = vsel %vm330, %v715, 0
        %727 = vmatprep.subr.bf16.mxu0 0
        %728 = vmatpush1.bf16.msra.mxu0 0
        %729 = vmatprep.subr.bf16.mxu0 0
        %730 = vmatpush1.bf16.msra.mxu0 0
        %731 = vmatprep.subr.bf16.mxu0 0
        %732 = vmatpush1.bf16.msra.mxu0 0
        %733 = vmatprep.subr.bf16.mxu0 %v725
        %734 = vmatpush1.bf16.msra.mxu0 %v722
        %735 = vmatprep.subr.bf16.mxu0 %v713
        %736 = vmatpush1.bf16.msra.mxu0 %v712
        %737 = vmatprep.subr.bf16.mxu0 %v711
        %738 = vmatpush1.bf16.msra.mxu0 %v710
        %739 = vmatprep.subr.bf16.mxu0 %v709
        %740 = vmatpush1.bf16.msra.mxu0 %v708
        %741 = vmatprep.subr.bf16.mxu0 %v707
        %742 = vmatpush1.bf16.msra.mxu0 %v706
        %743 = vmatprep.subr.bf16.mxu0 0
        %744 = vmatpush2.bf16.msra.mxu0 0
        %745 = vmatprep.subr.bf16.mxu0 0
        %746 = vmatpush2.bf16.msra.mxu0 0
        %747 = vmatprep.subr.bf16.mxu0 0
        %748 = vmatpush2.bf16.msra.mxu0 0
        %749 = vmatprep.subr.bf16.mxu0 0
        %750 = vmatpush2.bf16.msra.mxu0 0
        %751 = vmatprep.subr.bf16.mxu0 0
        %752 = vmatpush2.bf16.msra.mxu0 0
        %753 = vmatprep.subr.bf16.mxu0 0
        %754 = vmatpush2.bf16.msra.mxu0 0
        %755 = vmatprep.subr.bf16.mxu0 0
        %756 = vmatpush2.bf16.msra.mxu0 0
        %757 = vmatprep.subr.bf16.mxu0 0
        %758 = vmatpush2.bf16.msra.mxu0 0
        %759 = vmatprep.mubr.bf16.mxu0 0
        %760 = vmatmul.mubr.bf16.gmra.mxu0 %v719
        %v761 = vpop.f32.mrf.mxu0
        %v762 = vadd.f32 %v502, %v761
        %v763 = vpop.f32.mrf.mxu0
        %v764 = vadd.f32 %v504, %v763
        %v765 = vpop.f32.mrf.mxu0
        %v766 = vpop.f32.mrf.mxu0
        %767 = vdwg.mxu0
        %768 = vst [vmem:[%s215] sm:$0xff] %v762
        %769 = vst [vmem:[%s215 + $0x8] sm:$0xff] %v764
        %s770 = sand.u32 %s97, 1
        %s771 = scalar_lea.sflag [#allocation4], %s770
        %s772 = sand.u32 %s97, 1
        %s773 = smul.addr %s772, 16
        %s774 = scalar_lea.vmem [#allocation8], %s773
        // Predicated region
        $region45: #{tpu_custom_call.1} parent=31 // pred_check
          %p775 = pneg %p107
        $region46: #{tpu_custom_call.1} parent=31 // pred_check_branch
          %777 = sbr.rel (%p775) target = $region48
        $region47: #{tpu_custom_call.1} parent=31 // pred_region
          %s779 = ssub.s32 256, 256
          %780 = vsyncadd %s771, %s779
          %s781 = smul.addr %s21, 2
          %s782 = smul.addr %s781, 128
          %s783 = scalar_lea.hbm %s3, %s782
          %s785 = sshll.u32 %s774, 4
          %s786 = int_to_ptr.vmem [resolvable:$true] %s785
          %788 = dma.vmem_to_hbm [thread:$0]  %s786, 256, %s783, %s771
        $region48: #{tpu_custom_call.1} parent=31 // pred_fallthru
          _
      $region32: #{tpu_custom_call.1} parent=5 // pred_fallthru
        _
      %p789 = scmp.le.s32.totalorder 2, %s16
      // Predicated region
      $region49: #{tpu_custom_call.1} parent=5 // pred_check
        %p790 = pneg %p789
      $region50: #{tpu_custom_call.1} parent=5 // pred_check_branch
        %792 = sbr.rel (%p790) target = $region52
      $region51: #{tpu_custom_call.1} parent=5 // pred_region
        %s793 = ssub.s32 %s16, 2
        // Predicated region
        $region53: #{tpu_custom_call.1} parent=51 // pred_check
          %p794 = pneg %p113
        $region54: #{tpu_custom_call.1} parent=51 // pred_check_branch
          %796 = sbr.rel (%p794) target = $region56
        $region55: #{tpu_custom_call.1} parent=51 // pred_region
          %s797 = sand.u32 %s98, 1
          %s798 = scalar_lea.sflag [#allocation4], %s797
          %s799 = sand.u32 %s98, 1
          %s800 = smul.addr %s799, 16
          %s801 = scalar_lea.vmem [#allocation8], %s800
          %802 = dma.done %s798, 256
        $region56: #{tpu_custom_call.1} parent=51 // pred_fallthru
          _
      $region52: #{tpu_custom_call.1} parent=5 // pred_fallthru
        _
    $region6: #{tpu_custom_call.1} parent=1 // loop_footer
      %s20 = sadd.s32 1, %s16
    $region7: #{tpu_custom_call.1} parent=1 // loop_footer_branch
      %15 = sbr.rel target = $region3
    $region8: #{tpu_custom_call.1} parent=1 // loop_exit
      _
    %803 = vsyncpa [#allocation3], 1
    %s804 = scalar_lea.sflag [#allocation3], 1
    %805 = vsyncpa %s804, 1
    %806 = vsyncpa [#allocation6], 1
    %807 = vsyncpa [#allocation4], 1
    %s808 = scalar_lea.sflag [#allocation4], 1
    %809 = vsyncpa %s808, 1

</llo_original>
